<compile_context>
chip_gen: v7x
topology: tpu7x:2x2x1
jax: 0.10.0
libtpu: 0.0.40
codegen_flags: <defaults>
</compile_context>

<pallas_src>
import math

import jax
import jax.numpy as jnp
from jax.experimental import pallas as pl
from jax.experimental.pallas import tpu as pltpu


def _linear_nobias_kernel(x_ref, w_ref, o_ref):
    # x_ref: (TM, K), w_ref: (K, Dp), o_ref: (TM, Dp)
    o_ref[...] = jnp.dot(
        x_ref[...], w_ref[...], preferred_element_type=jnp.float32
    ).astype(o_ref.dtype)


def _round_up(x, m):
    return ((x + m - 1) // m) * m


def time_feature_embedding(x, weight, *, row_tile=256):
    """
    x:      [..., d_inp]  float32
    weight: [d_inp, d_model]  (transpose of PyTorch Linear weight [d_model, d_inp])
    returns [..., d_model]
    """
    *lead, d_inp = x.shape
    assert weight.shape[0] == d_inp
    d_model = weight.shape[1]

    rows = int(math.prod(lead)) if lead else 1
    x2 = x.reshape(rows, d_inp)

    # Lane-dense output: pad d_model up to a multiple of 128 (unmasked stores).
    d_pad = max(_round_up(d_model, 128), 128)
    w = weight if d_pad == d_model else jnp.pad(
        weight, ((0, 0), (0, d_pad - d_model)))

    # Row tiling: sublane-aligned (multiple of 8) tiles of up to `row_tile` rows.
    tm = min(row_tile, _round_up(rows, 8))
    rows_pad = _round_up(rows, tm)
    if rows_pad != rows:
        x2 = jnp.pad(x2, ((0, rows_pad - rows), (0, 0)))

    grid = (rows_pad // tm,)
    itemsize = jnp.dtype(x.dtype).itemsize

    out = pl.pallas_call(
        _linear_nobias_kernel,
        out_shape=jax.ShapeDtypeStruct((rows_pad, d_pad), x.dtype),
        grid_spec=pltpu.PrefetchScalarGridSpec(
            num_scalar_prefetch=0,
            grid=grid,
            in_specs=[
                pl.BlockSpec((tm, d_inp), lambda i: (i, 0)),     # row tile of x
                pl.BlockSpec((d_inp, d_pad), lambda i: (0, 0)),  # weight: resident
            ],
            out_specs=pl.BlockSpec((tm, d_pad), lambda i: (i, 0)),
        ),
        compiler_params=pltpu.CompilerParams(
            dimension_semantics=("parallel",),       # no reduction axis
            vmem_limit_bytes=32 * 1024 * 1024,       # safe on v5e/v6e/v7x
        ),
        cost_estimate=pl.CostEstimate(
            flops=2 * rows_pad * d_inp * d_pad,
            transcendentals=0,
            bytes_accessed=(rows_pad * d_inp + d_inp * d_pad + rows_pad * d_pad)
            * itemsize,
        ),
    )(x2, w)

    out = out[:rows, :d_model]
    return out.reshape(*lead, d_model)


if __name__ == "__main__":
    key = jax.random.PRNGKey(0)

    # Small shapes consistent with the module: batch=2, seq=8, freq='h' -> d_inp=4,
    # d_model=32 (hidden).
    freq_map = {'h': 4, 't': 5, 's': 6, 'm': 1, 'a': 1, 'w': 2, 'd': 3, 'b': 3}
    B, L, d_model = 2, 8, 32
    d_inp = freq_map['h']

    k_x, k_w = jax.random.split(key, 2)
    x = jax.random.normal(k_x, (B, L, d_inp), dtype=jnp.float32)

    # Deterministic Linear(d_inp, d_model, bias=False) weight, stored as W^T = [d_inp, d_model].
    bound = 1.0 / math.sqrt(d_inp)
    weight = jax.random.uniform(k_w, (d_inp, d_model), jnp.float32, -bound, bound)

    out = time_feature_embedding(x, weight)
    out = jax.block_until_ready(out)

    # Pure-JAX reference.
    ref = jnp.einsum("bli,im->blm", x, weight)
    assert out.shape == (B, L, d_model)
    assert jnp.allclose(out, ref, atol=1e-5, rtol=1e-5)

    print("KERNEL_OK")
</pallas_src>

<mosaic_0001>
module attributes {stable_mosaic.version = 11 : i64} {
  func.func @_linear_nobias_kernel(%arg0: i32, %arg1: memref<16x4xf32, #tpu.memory_space<vmem>>, %arg2: memref<4x128xf32, #tpu.memory_space<vmem>>, %arg3: memref<16x128xf32, #tpu.memory_space<vmem>>) attributes {dimension_semantics = [#tpu.dimension_semantics<parallel>], iteration_bounds = array<i64: 1>, scalar_prefetch = 0 : i64, scratch_operands = 0 : i64, tpu.core_type = #tpu.core_type<tc>, window_params = [{transform_indices = @transform_0, window_bounds = array<i64: 16, 4>}, {pipeline_mode = #tpu.pipeline_mode<synchronous>, transform_indices = @transform_1, window_bounds = array<i64: 4, 128>}, {transform_indices = @transform_2, window_bounds = array<i64: 16, 128>}]} {
    %c0 = arith.constant 0 : index
    %c0_0 = arith.constant 0 : index
    %0 = vector.load %arg1[%c0, %c0_0] : memref<16x4xf32, #tpu.memory_space<vmem>>, vector<16x4xf32>
    %c0_1 = arith.constant 0 : index
    %c0_2 = arith.constant 0 : index
    %1 = vector.load %arg2[%c0_1, %c0_2] : memref<4x128xf32, #tpu.memory_space<vmem>>, vector<4x128xf32>
    %cst = arith.constant dense<0.000000e+00> : vector<16x128xf32>
    %2 = tpu.matmul %0, %1, %cst {dimension_numbers = #tpu.dot_dimension_numbers<[1], [0], [0], [1], [0, 0, 1, 1], [], []>} : vector<16x4xf32>, vector<4x128xf32>, vector<16x128xf32> -> vector<16x128xf32>
    %c0_3 = arith.constant 0 : index
    %c0_4 = arith.constant 0 : index
    %3 = vector.load %arg3[%c0_3, %c0_4] : memref<16x128xf32, #tpu.memory_space<vmem>>, vector<16x128xf32>
    tpu.vector_store %arg3[%c0_3, %c0_4], %2 {strides = array<i32>} : memref<16x128xf32, #tpu.memory_space<vmem>>, vector<16x128xf32>,
    return
  }
  func.func @transform_0(%arg0: i32) -> (i32, i32) {
    %c0_i32 = arith.constant 0 : i32
    %c0_i32_0 = arith.constant 0 : i32
    return %arg0, %c0_i32 : i32, i32
  }
  func.func @transform_1(%arg0: i32) -> (i32, i32) {
    %c0_i32 = arith.constant 0 : i32
    %c0_i32_0 = arith.constant 0 : i32
    %c0_i32_1 = arith.constant 0 : i32
    return %c0_i32, %c0_i32_0 : i32, i32
  }
  func.func @transform_2(%arg0: i32) -> (i32, i32) {
    %c0_i32 = arith.constant 0 : i32
    %c0_i32_0 = arith.constant 0 : i32
    return %arg0, %c0_i32 : i32, i32
  }
}

</mosaic_0001>

<llo_original>
// kernel: tpu_custom_call.1
$region0: #{tpu_custom_call.1}
  #allocation0 [shape = 'u32[]', space=smem, size = 0x4, offset = 0x4, fixed_abs, tag = 'smem constant byte address 0x4 - core index']
  #allocation1 [shape = 'u32[144,128]{1,0:T(1,128)}', space=vmem, size = 0x12000, scoped, tag = 'internal scratch']
  %s0 = inlined_call_operand.vmem [shape: f32[16,4], index: 0, kind: input, shape index: {}]
  %s1 = inlined_call_operand.vmem [shape: f32[4,128], index: 1, kind: input, shape index: {}]
  %s2 = inlined_call_operand.hbm [shape: f32[16,128], index: 2, kind: output, shape index: {}]
  %s3 = sld [smem:[#allocation0]]
  $region18: #{tpu_custom_call.1} parent=0
    _
  %s5 = ssub.s32 1, %s3
  %s6 = scalar_select 0, %s5, %s3
  $region1: #{tpu_custom_call.1} parent=0
    #allocation2 [shape = 'u8[8192]{0}', space=vmem, size = 0x2000, scoped, tag = 'output window, operand 0, single buffered']
    #allocation3 [shape = 's32[1]{0}', space=sflag, size = 0x4, scoped, tag = 'scoped memory for tpu_custom_call.1']
    %7 = vsyncpa [#allocation3], 0
    // Predicated region
    $region2: #{tpu_custom_call.1} parent=1 // pred_check
      _
    $region3: #{tpu_custom_call.1} parent=1 // pred_check_branch
      %9 = sbr.rel (0) target = $region5
    $region4: #{tpu_custom_call.1} parent=1 // pred_region
      _
    $region5: #{tpu_custom_call.1} parent=1 // pred_fallthru
      _
    // Predicated region
    $region6: #{tpu_custom_call.1} parent=1 // pred_check
      _
    $region7: #{tpu_custom_call.1} parent=1 // pred_check_branch
      %11 = sbr.rel (0) target = $region9
    $region8: #{tpu_custom_call.1} parent=1 // pred_region
      _
    $region9: #{tpu_custom_call.1} parent=1 // pred_fallthru
      _
    %v12 = vld [vmem:[%s0] sm:$0xff]
    %v13 = vld [vmem:[%s0 + $0x8] sm:$0xff]
    %v14 = vld [vmem:[%s1] sm:$0xf]
    %vm15 = vcmask 31744
    %v17 = vsel %vm15, %v12, 0
    %v20 = vsel %vm15, %v13, 0
    %vm22 = vcmask 1043456
    %v24 = vsel %vm22, %v14, 0
    %26 = vmatprep.subr.mxu0 0.0
    %27 = vmatpush1.msra.mxu0 %v24
    %28 = vmatprep.subr.mxu0 0.0
    %29 = vmatpush1.msra.mxu0 0.0
    %30 = vmatprep.subr.mxu0 0.0
    %31 = vmatpush1.msra.mxu0 0.0
    %32 = vmatprep.subr.mxu0 0.0
    %33 = vmatpush1.msra.mxu0 0.0
    %34 = vmatprep.subr.mxu0 0.0
    %35 = vmatpush1.msra.mxu0 0.0
    %36 = vmatprep.subr.mxu0 0.0
    %37 = vmatpush1.msra.mxu0 0.0
    %38 = vmatprep.subr.mxu0 0.0
    %39 = vmatpush1.msra.mxu0 0.0
    %40 = vmatprep.subr.mxu0 0.0
    %41 = vmatpush1.msra.mxu0 0.0
    %42 = vmatprep.subr.mxu0 0.0
    %43 = vmatpush1.msra.mxu0 0.0
    %44 = vmatprep.subr.mxu0 0.0
    %45 = vmatpush1.msra.mxu0 0.0
    %46 = vmatprep.subr.mxu0 0.0
    %47 = vmatpush1.msra.mxu0 0.0
    %48 = vmatprep.subr.mxu0 0.0
    %49 = vmatpush1.msra.mxu0 0.0
    %50 = vmatprep.subr.mxu0 0.0
    %51 = vmatpush1.msra.mxu0 0.0
    %52 = vmatprep.subr.mxu0 0.0
    %53 = vmatpush1.msra.mxu0 0.0
    %54 = vmatprep.subr.mxu0 0.0
    %55 = vmatpush1.msra.mxu0 0.0
    %56 = vmatprep.subr.mxu0 0.0
    %57 = vmatpush1.msra.mxu0 0.0
    %58 = vmatprep.subr.mxu0 0.0
    %59 = vmatpush1.msra.mxu0 0.0
    %60 = vmatprep.subr.mxu0 0.0
    %61 = vmatpush1.msra.mxu0 0.0
    %62 = vmatprep.subr.mxu0 0.0
    %63 = vmatpush1.msra.mxu0 0.0
    %64 = vmatprep.subr.mxu0 0.0
    %65 = vmatpush1.msra.mxu0 0.0
    %66 = vmatprep.subr.mxu0 0.0
    %67 = vmatpush1.msra.mxu0 0.0
    %68 = vmatprep.subr.mxu0 0.0
    %69 = vmatpush1.msra.mxu0 0.0
    %70 = vmatprep.subr.mxu0 0.0
    %71 = vmatpush1.msra.mxu0 0.0
    %72 = vmatprep.subr.mxu0 0.0
    %73 = vmatpush1.msra.mxu0 0.0
    %74 = vmatprep.subr.mxu0 0.0
    %75 = vmatpush1.msra.mxu0 0.0
    %76 = vmatprep.subr.mxu0 0.0
    %77 = vmatpush1.msra.mxu0 0.0
    %78 = vmatprep.subr.mxu0 0.0
    %79 = vmatpush1.msra.mxu0 0.0
    %80 = vmatprep.subr.mxu0 0.0
    %81 = vmatpush1.msra.mxu0 0.0
    %82 = vmatprep.subr.mxu0 0.0
    %83 = vmatpush1.msra.mxu0 0.0
    %84 = vmatprep.subr.mxu0 0.0
    %85 = vmatpush1.msra.mxu0 0.0
    %86 = vmatprep.subr.mxu0 0.0
    %87 = vmatpush1.msra.mxu0 0.0
    %88 = vmatprep.subr.mxu0 0.0
    %89 = vmatpush1.msra.mxu0 0.0
    %90 = vmatprep.mubr.f32.mxu0 0.0
    %91 = vmatmul.mubr.f32.gmra.mrb[0].mxu0 %v17
    %v92 = vpop.f32.mrb[0].mxu0
    %v93 = vadd.f32 0.0, %v92
    %v94 = vpop.f32.mrb[0].mxu0
    %95 = vmatprep.mubr.f32.mxu0 0.0
    %96 = vmatmul.mubr.f32.gmra.mrb[0].mxu0 %v20
    %v97 = vpop.f32.mrb[0].mxu0
    %v98 = vadd.f32 0.0, %v97
    %v99 = vpop.f32.mrb[0].mxu0
    %100 = vdwg.mxu0
    %101 = vst [vmem:[#allocation2] sm:$0xff] %v93
    %102 = vst [vmem:[#allocation2 + $0x8] sm:$0xff] %v98
    // Predicated region
    $region10: #{tpu_custom_call.1} parent=1 // pred_check
      _
    $region11: #{tpu_custom_call.1} parent=1 // pred_check_branch
      %104 = sbr.rel (0) target = $region13
    $region12: #{tpu_custom_call.1} parent=1 // pred_region
      %s106 = ssub.s32 256, 256
      %107 = vsyncadd [#allocation3], %s106
      %s108 = sshll.u32 [#allocation2], 4
      %s109 = int_to_ptr.vmem [resolvable:$true] %s108
      %114 = dma.vmem_to_hbm [thread:$0]  %s109, 256, %s2, [#allocation3], 128, 128, 8
    $region13: #{tpu_custom_call.1} parent=1 // pred_fallthru
      _
    // Predicated region
    $region14: #{tpu_custom_call.1} parent=1 // pred_check
      _
    $region15: #{tpu_custom_call.1} parent=1 // pred_check_branch
      %116 = sbr.rel (0) target = $region17
    $region16: #{tpu_custom_call.1} parent=1 // pred_region
      %117 = dma.done [#allocation3], 256
    $region17: #{tpu_custom_call.1} parent=1 // pred_fallthru
      _
    %118 = vsyncpa [#allocation3], 1

</llo_original>
